<compile_context>
chip_gen: v5e
topology: v5e:2x2
jax: 0.10.0
libtpu: 0.0.40
codegen_flags: <defaults>
</compile_context>

<pallas_src>
import functools

import jax
import jax.numpy as jnp
import numpy as np
from jax.experimental import pallas as pl
from jax.experimental.pallas import tpu as pltpu


def _round_up(x, m):
    return (x + m - 1) // m * m


@functools.lru_cache(maxsize=None)
def _interp_matrix_np(out_size, in_size):
    """1-D bilinear interp matrix matching F.interpolate(align_corners=False)."""
    scale = np.float32(in_size / out_size)
    dst = np.arange(out_size, dtype=np.float32)
    src = (dst + np.float32(0.5)) * scale - np.float32(0.5)
    src = np.maximum(src, np.float32(0.0))            # PyTorch clamps negatives to 0
    i0 = np.minimum(np.floor(src).astype(np.int64), in_size - 1)
    i1 = np.minimum(i0 + 1, in_size - 1)
    w1 = (src - i0.astype(np.float32)).astype(np.float32)
    w0 = (np.float32(1.0) - w1).astype(np.float32)
    m = np.zeros((out_size, in_size), np.float32)
    rows = np.arange(out_size)
    np.add.at(m, (rows, i0), w0)
    np.add.at(m, (rows, i1), w1)
    return m


def _fuse_kernel(xl_ref, xh_ref, w1_ref, w2_ref, bias_ref, ah_ref, aw_ref, out_ref):
    tile_h = ah_ref.shape[0]
    whi, wlo = aw_ref.shape                     # hi-res W, low-res w (static)
    cp, op = w1_ref.shape

    # Tiny casts of the interp matrices (instead of upcasting whole x_h to f32).
    ah = ah_ref[...].astype(jnp.bfloat16)       # (tile_h, h)
    aw = aw_ref[...].astype(jnp.bfloat16)       # (W, w)

    # ---- high-level branch --------------------------------------------------
    # (1) H-direction bilinear interp as ONE bf16 MXU matmul, f32 accumulation:
    #     (tile_h, h) @ (h, w*Cp) -> (tile_h, w*Cp).  Lane dim is large.
    p = jnp.dot(ah, xh_ref[0], preferred_element_type=jnp.float32)

    # (2) fuse2 1x1 conv (+folded BN) at LOW W-resolution (exact by linearity):
    #     (tile_h*w, Cp) @ (Cp, Op) on the bf16 MXU path.
    p = p.reshape(tile_h * wlo, cp).astype(jnp.bfloat16)
    q = jnp.dot(p, w2_ref[...], preferred_element_type=jnp.float32)

    # (3) W-direction bilinear interp as a batched bf16 matmul producing the
    #     (tile_h, W, Op) layout directly (no cross-lane transpose of result).
    q3 = q.reshape(tile_h, wlo, op).astype(jnp.bfloat16)
    aw_b = jnp.broadcast_to(aw[None, :, :], (tile_h, whi, wlo))
    feat = jnp.einsum("tWj,tjo->tWo", aw_b, q3,
                      preferred_element_type=jnp.float32)
    feat = feat.reshape(tile_h * whi, op)

    # ---- low-level branch + sum ---------------------------------------------
    inp = jnp.dot(xl_ref[0], w1_ref[...], preferred_element_type=jnp.float32)

    out_ref[0] = (inp + feat + bias_ref[...]).astype(out_ref.dtype)


def _chip_budget():
    """(row cap for tile_h*W, vmem_limit_bytes) chosen per TPU generation."""
    try:
        vmem = getattr(pltpu.get_tpu_info(), "vmem_capacity_bytes", 64 * 1024 * 1024)
    except Exception:  # CPU interpret / older jax: assume the tighter budget
        vmem = 64 * 1024 * 1024
    if vmem >= 100 * 1024 * 1024:          # v5e / v6e: 128 MiB physical VMEM
        return 8192, 96 * 1024 * 1024
    return 4096, 48 * 1024 * 1024          # v7x: 64 MiB per TensorCore


def _pick_tile_h(B, H, W, row_cap):
    # Largest row-tile that divides H, keeps blocks (8,128)-legal and fits the
    # per-generation row budget; with B==1 prefer >=2 tiles so v7x's two
    # TensorCores both get parallel work.
    valid = [d for d in range(1, H + 1) if H % d == 0 and (d % 8 == 0 or d == H)]
    fitting = [d for d in valid if d * W <= row_cap]
    cands = fitting if fitting else [min(valid)]
    if B == 1:
        multi = [d for d in cands if H // d >= 2]
        if multi:
            cands = multi
    return max(cands)


def init_params(key, inp, oup, eps=1e-5):
    """Deterministic synthetic weights; eval-mode BN folded into the 1x1 conv."""
    k1, k2 = jax.random.split(key)
    conv1 = jax.random.normal(k1, (oup, inp), jnp.float32) * 0.1   # (oup, inp, 1, 1) squeezed
    conv2 = jax.random.normal(k2, (oup, inp), jnp.float32) * 0.1
    scale = 1.0 / jnp.sqrt(1.0 + eps)   # gamma / sqrt(var + eps), gamma=1, var=1
    w1 = (conv1 * scale).T              # (inp, oup)
    b1 = jnp.zeros((1, oup), jnp.float32)
    w2 = (conv2 * scale).T
    b2 = jnp.zeros((1, oup), jnp.float32)
    return w1, b1, w2, b2


def fuse_block_sum(x_l, x_h, params, tile_h=None):
    """x_l: (B, C, H, W), x_h: (B, C, h, w) NCHW float32 -> (B, oup, H, W)."""
    w1, b1, w2, b2 = params
    B, C, H, W = x_l.shape
    _, _, h, w = x_h.shape
    oup = w1.shape[1]

    row_cap, vmem_limit = _chip_budget()
    if tile_h is None:
        tile_h = _pick_tile_h(B, H, W, row_cap)
    assert H % tile_h == 0 and (tile_h % 8 == 0 or tile_h == H)
    n_t = H // tile_h

    # Lane-dense channel dims (multiples of 128); zero padding is exact.
    Cp = _round_up(C, 128)
    Op = _round_up(oup, 128)

    # NCHW -> channels-last (wrapper-side HBM glue).  x_l rows flattened;
    # x_h laid out (h, w*Cp) so the H-interp is a single wide matmul.
    xl_flat = jnp.transpose(x_l, (0, 2, 3, 1)).reshape(B, H * W, C)
    xl_flat = jnp.pad(xl_flat, ((0, 0), (0, 0), (0, Cp - C))).astype(jnp.bfloat16)
    xh_t = jnp.transpose(x_h, (0, 2, 3, 1))                           # (B, h, w, C)
    xh_t = jnp.pad(xh_t, ((0, 0), (0, 0), (0, 0), (0, Cp - C)))
    xh_t = xh_t.reshape(B, h, w * Cp).astype(jnp.bfloat16)

    w1p = jnp.pad(w1, ((0, Cp - C), (0, Op - oup))).astype(jnp.bfloat16)
    w2p = jnp.pad(w2, ((0, Cp - C), (0, Op - oup))).astype(jnp.bfloat16)
    bias = jnp.pad(b1 + b2, ((0, 0), (0, Op - oup))).astype(jnp.float32)

    # Separable bilinear weights (cached numpy constants, KBs even at real sizes).
    Ah = jnp.asarray(_interp_matrix_np(H, h))                         # (H, h) f32
    Aw = jnp.asarray(_interp_matrix_np(W, w))                         # (W, w) f32

    out = pl.pallas_call(
        _fuse_kernel,
        out_shape=jax.ShapeDtypeStruct((B, H * W, Op), jnp.float32),
        grid_spec=pltpu.PrefetchScalarGridSpec(
            num_scalar_prefetch=0,
            grid=(B, n_t),
            in_specs=[
                pl.BlockSpec((1, tile_h * W, Cp), lambda b, t: (b, t, 0)),  # x_l rows
                pl.BlockSpec((1, h, w * Cp), lambda b, t: (b, 0, 0)),       # x_h (h, w*C)
                pl.BlockSpec((Cp, Op), lambda b, t: (0, 0)),                # w1
                pl.BlockSpec((Cp, Op), lambda b, t: (0, 0)),                # w2
                pl.BlockSpec((1, Op), lambda b, t: (0, 0)),                 # b1+b2 folded
                pl.BlockSpec((tile_h, h), lambda b, t: (t, 0)),             # Ah row tile
                pl.BlockSpec((W, w), lambda b, t: (0, 0)),                  # Aw (un-broadcast)
            ],
            out_specs=pl.BlockSpec((1, tile_h * W, Op), lambda b, t: (b, t, 0)),
        ),
        compiler_params=pltpu.CompilerParams(
            dimension_semantics=("parallel", "parallel"),
            vmem_limit_bytes=vmem_limit,
        ),
    )(xl_flat, xh_t, w1p, w2p, bias, Ah, Aw)

    out = out[:, :, :oup]
    return jnp.transpose(out.reshape(B, H, W, oup), (0, 3, 1, 2))


def _reference(x_l, x_h, params):
    """Pure-JAX reference mirroring the PyTorch forward (eval-mode BN) with the
    same bf16 quantization points as the kernel (inputs, weights, interp
    matrices, and the two upsample/conv intermediates)."""
    w1, b1, w2, b2 = params
    _, _, H, W = x_l.shape
    _, _, h, w = x_h.shape
    q = lambda a: a.astype(jnp.bfloat16).astype(jnp.float32)
    Ah = q(jnp.asarray(_interp_matrix_np(H, h)))
    Aw = q(jnp.asarray(_interp_matrix_np(W, w)))

    inp = jnp.einsum("bcYX,co->boYX", q(x_l), q(w1))
    p = jnp.einsum("Yy,bcyx->bcYx", Ah, q(x_h))        # H-interp (f32 acc)
    ker = jnp.einsum("bcYx,co->boYx", q(p), q(w2))     # fuse2 conv at low W-res
    feat = jnp.einsum("Xx,boYx->boYX", Aw, q(ker))     # W-interp
    return inp + feat + b1.reshape(1, -1, 1, 1) + b2.reshape(1, -1, 1, 1)


if __name__ == "__main__":
    key = jax.random.PRNGKey(0)
    k_xl, k_xh, k_p = jax.random.split(key, 3)

    B, C, oup = 2, 4, 8
    H = W = 16      # x_l spatial
    h = w = 8       # x_h spatial (lower resolution, gets upsampled)

    x_l = jax.random.normal(k_xl, (B, C, H, W), jnp.float32)
    x_h = jax.random.normal(k_xh, (B, C, h, w), jnp.float32)
    params = init_params(k_p, C, oup)

    out = fuse_block_sum(x_l, x_h, params, tile_h=8)   # (2, 2) grid: exercises tiling
    out = jax.block_until_ready(out)

    ref = _reference(x_l, x_h, params)
    assert out.shape == (B, oup, H, W)
    # bf16 activations / weights / interp with f32 accumulation -> bf16-level tol.
    assert jnp.allclose(out, ref, atol=2e-2, rtol=2e-2), "mismatch vs reference"

    print("KERNEL_OK")
</pallas_src>

<mosaic_0001>
module attributes {stable_mosaic.version = 11 : i64} {
  func.func @_fuse_kernel(%arg0: i32, %arg1: i32, %arg2: memref<1x128x128xbf16, #tpu.memory_space<vmem>>, %arg3: memref<1x8x1024xbf16, #tpu.memory_space<vmem>>, %arg4: memref<128x128xbf16, #tpu.memory_space<vmem>>, %arg5: memref<128x128xbf16, #tpu.memory_space<vmem>>, %arg6: memref<1x128xf32, #tpu.memory_space<vmem>>, %arg7: memref<8x8xf32, #tpu.memory_space<vmem>>, %arg8: memref<16x8xf32, #tpu.memory_space<vmem>>, %arg9: memref<1x128x128xf32, #tpu.memory_space<vmem>>) attributes {dimension_semantics = [#tpu.dimension_semantics<parallel>, #tpu.dimension_semantics<parallel>], iteration_bounds = array<i64: 2, 2>, scalar_prefetch = 0 : i64, scratch_operands = 0 : i64, tpu.core_type = #tpu.core_type<tc>, window_params = [{transform_indices = @transform_0, window_bounds = array<i64: 1, 128, 128>}, {transform_indices = @transform_1, window_bounds = array<i64: 1, 8, 1024>}, {pipeline_mode = #tpu.pipeline_mode<synchronous>, transform_indices = @transform_2, window_bounds = array<i64: 128, 128>}, {pipeline_mode = #tpu.pipeline_mode<synchronous>, transform_indices = @transform_3, window_bounds = array<i64: 128, 128>}, {pipeline_mode = #tpu.pipeline_mode<synchronous>, transform_indices = @transform_4, window_bounds = array<i64: 1, 128>}, {transform_indices = @transform_5, window_bounds = array<i64: 8, 8>}, {pipeline_mode = #tpu.pipeline_mode<synchronous>, transform_indices = @transform_6, window_bounds = array<i64: 16, 8>}, {transform_indices = @transform_7, window_bounds = array<i64: 1, 128, 128>}]} {
    %c0 = arith.constant 0 : index
    %c0_0 = arith.constant 0 : index
    %0 = vector.load %arg7[%c0, %c0_0] : memref<8x8xf32, #tpu.memory_space<vmem>>, vector<8x8xf32>
    %1 = arith.truncf %0 : vector<8x8xf32> to vector<8x8xbf16>
    %c0_1 = arith.constant 0 : index
    %c0_2 = arith.constant 0 : index
    %2 = vector.load %arg8[%c0_1, %c0_2] : memref<16x8xf32, #tpu.memory_space<vmem>>, vector<16x8xf32>
    %3 = arith.truncf %2 : vector<16x8xf32> to vector<16x8xbf16>
    %c0_3 = arith.constant 0 : index
    %c0_4 = arith.constant 0 : index
    %c0_5 = arith.constant 0 : index
    %4 = vector.load %arg3[%c0_3, %c0_4, %c0_5] : memref<1x8x1024xbf16, #tpu.memory_space<vmem>>, vector<1x8x1024xbf16>
    %5 = vector.shape_cast %4 : vector<1x8x1024xbf16> to vector<8x1024xbf16>
    %cst = arith.constant dense<0.000000e+00> : vector<8x1024xf32>
    %6 = tpu.matmul %1, %5, %cst {dimension_numbers = #tpu.dot_dimension_numbers<[1], [0], [0], [1], [0, 0, 1, 1], [], []>} : vector<8x8xbf16>, vector<8x1024xbf16>, vector<8x1024xf32> -> vector<8x1024xf32>
    %7 = vector.shape_cast %6 : vector<8x1024xf32> to vector<64x128xf32>
    %8 = arith.truncf %7 : vector<64x128xf32> to vector<64x128xbf16>
    %c0_6 = arith.constant 0 : index
    %c0_7 = arith.constant 0 : index
    %9 = vector.load %arg5[%c0_6, %c0_7] : memref<128x128xbf16, #tpu.memory_space<vmem>>, vector<128x128xbf16>
    %cst_8 = arith.constant dense<0.000000e+00> : vector<64x128xf32>
    %10 = tpu.matmul %8, %9, %cst_8 {dimension_numbers = #tpu.dot_dimension_numbers<[1], [0], [0], [1], [0, 0, 1, 1], [], []>} : vector<64x128xbf16>, vector<128x128xbf16>, vector<64x128xf32> -> vector<64x128xf32>
    %11 = vector.shape_cast %10 : vector<64x128xf32> to vector<8x8x128xf32>
    %12 = arith.truncf %11 : vector<8x8x128xf32> to vector<8x8x128xbf16>
    %13 = vector.shape_cast %3 : vector<16x8xbf16> to vector<1x16x8xbf16>
    %14 = vector.shape_cast %13 : vector<1x16x8xbf16> to vector<1x16x8xbf16>
    %15 = vector.broadcast %14 : vector<1x16x8xbf16> to vector<8x16x8xbf16>
    "tpu.trace_start"() <{level = 10 : i32, message = "tWj,tjo->tWo"}> : () -> ()
    %cst_9 = arith.constant dense<0.000000e+00> : vector<8x16x128xf32>
    %16 = tpu.matmul %15, %12, %cst_9 {dimension_numbers = #tpu.dot_dimension_numbers<[2], [1], [1], [2], [0, 0, 0, 1, 1, 2], [0], [0]>} : vector<8x16x8xbf16>, vector<8x8x128xbf16>, vector<8x16x128xf32> -> vector<8x16x128xf32>
    "tpu.trace_stop"() : () -> ()
    %17 = vector.shape_cast %16 : vector<8x16x128xf32> to vector<128x128xf32>
    %c0_10 = arith.constant 0 : index
    %c0_11 = arith.constant 0 : index
    %c0_12 = arith.constant 0 : index
    %18 = vector.load %arg2[%c0_10, %c0_11, %c0_12] : memref<1x128x128xbf16, #tpu.memory_space<vmem>>, vector<1x128x128xbf16>
    %19 = vector.shape_cast %18 : vector<1x128x128xbf16> to vector<128x128xbf16>
    %c0_13 = arith.constant 0 : index
    %c0_14 = arith.constant 0 : index
    %20 = vector.load %arg4[%c0_13, %c0_14] : memref<128x128xbf16, #tpu.memory_space<vmem>>, vector<128x128xbf16>
    %cst_15 = arith.constant dense<0.000000e+00> : vector<128x128xf32>
    %21 = tpu.matmul %19, %20, %cst_15 {dimension_numbers = #tpu.dot_dimension_numbers<[1], [0], [0], [1], [0, 0, 1, 1], [], []>} : vector<128x128xbf16>, vector<128x128xbf16>, vector<128x128xf32> -> vector<128x128xf32>
    %22 = arith.addf %21, %17 : vector<128x128xf32>
    %c0_16 = arith.constant 0 : index
    %c0_17 = arith.constant 0 : index
    %23 = vector.load %arg6[%c0_16, %c0_17] : memref<1x128xf32, #tpu.memory_space<vmem>>, vector<1x128xf32>
    %24 = vector.broadcast %23 : vector<1x128xf32> to vector<128x128xf32>
    %25 = arith.addf %22, %24 : vector<128x128xf32>
    %c0_18 = arith.constant 0 : index
    %c0_19 = arith.constant 0 : index
    %c0_20 = arith.constant 0 : index
    %26 = vector.load %arg9[%c0_18, %c0_19, %c0_20] : memref<1x128x128xf32, #tpu.memory_space<vmem>>, vector<1x128x128xf32>
    %27 = vector.shape_cast %26 : vector<1x128x128xf32> to vector<128x128xf32>
    %28 = vector.shape_cast %25 : vector<128x128xf32> to vector<1x128x128xf32>
    tpu.vector_store %arg9[%c0_18, %c0_19, %c0_20], %28 {strides = array<i32>} : memref<1x128x128xf32, #tpu.memory_space<vmem>>, vector<1x128x128xf32>,
    return
  }
  func.func @transform_0(%arg0: i32, %arg1: i32) -> (i32, i32, i32) {
    %c0_i32 = arith.constant 0 : i32
    %c0_i32_0 = arith.constant 0 : i32
    return %arg0, %arg1, %c0_i32 : i32, i32, i32
  }
  func.func @transform_1(%arg0: i32, %arg1: i32) -> (i32, i32, i32) {
    %c0_i32 = arith.constant 0 : i32
    %c0_i32_0 = arith.constant 0 : i32
    %c0_i32_1 = arith.constant 0 : i32
    return %arg0, %c0_i32, %c0_i32_0 : i32, i32, i32
  }
  func.func @transform_2(%arg0: i32, %arg1: i32) -> (i32, i32) {
    %c0_i32 = arith.constant 0 : i32
    %c0_i32_0 = arith.constant 0 : i32
    %c0_i32_1 = arith.constant 0 : i32
    return %c0_i32, %c0_i32_0 : i32, i32
  }
  func.func @transform_3(%arg0: i32, %arg1: i32) -> (i32, i32) {
    %c0_i32 = arith.constant 0 : i32
    %c0_i32_0 = arith.constant 0 : i32
    %c0_i32_1 = arith.constant 0 : i32
    return %c0_i32, %c0_i32_0 : i32, i32
  }
  func.func @transform_4(%arg0: i32, %arg1: i32) -> (i32, i32) {
    %c0_i32 = arith.constant 0 : i32
    %c0_i32_0 = arith.constant 0 : i32
    %c0_i32_1 = arith.constant 0 : i32
    return %c0_i32, %c0_i32_0 : i32, i32
  }
  func.func @transform_5(%arg0: i32, %arg1: i32) -> (i32, i32) {
    %c0_i32 = arith.constant 0 : i32
    %c0_i32_0 = arith.constant 0 : i32
    return %arg1, %c0_i32 : i32, i32
  }
  func.func @transform_6(%arg0: i32, %arg1: i32) -> (i32, i32) {
    %c0_i32 = arith.constant 0 : i32
    %c0_i32_0 = arith.constant 0 : i32
    %c0_i32_1 = arith.constant 0 : i32
    return %c0_i32, %c0_i32_0 : i32, i32
  }
  func.func @transform_7(%arg0: i32, %arg1: i32) -> (i32, i32, i32) {
    %c0_i32 = arith.constant 0 : i32
    %c0_i32_0 = arith.constant 0 : i32
    return %arg0, %arg1, %c0_i32 : i32, i32, i32
  }
}

</mosaic_0001>

<llo_original>
// kernel: tpu_custom_call.1
$region0: #{tpu_custom_call.1}
  #allocation0 [shape = 'u32[]', space=smem, size = 0x4, offset = 0x4, fixed_abs, tag = 'smem constant byte address 0x4 - core index']
  #allocation1 [shape = 'u32[72,128]{1,0:T(1,128)}', space=vmem, size = 0x9000, scoped, tag = 'internal scratch']
  %s0 = inlined_call_operand.hbm [shape: bf16[2,256,128], index: 0, kind: input, shape index: {}]
  %s1 = inlined_call_operand.hbm [shape: bf16[2,8,1024], index: 1, kind: input, shape index: {}]
  %s2 = inlined_call_operand.hbm [shape: bf16[128,128], index: 2, kind: input, shape index: {}]
  %s3 = inlined_call_operand.hbm [shape: bf16[128,128], index: 3, kind: input, shape index: {}]
  %s4 = inlined_call_operand.vmem [shape: f32[1,128], index: 4, kind: input, shape index: {}]
  %s5 = inlined_call_operand.vmem [shape: f32[16,8], index: 5, kind: input, shape index: {}]
  %s6 = inlined_call_operand.vmem [shape: f32[16,8], index: 6, kind: input, shape index: {}]
  %s7 = inlined_call_operand.hbm [shape: f32[2,256,128], index: 7, kind: output, shape index: {}]
  %s8 = sld [smem:[#allocation0]]
  $region77: #{tpu_custom_call.1} parent=0
    _
  %s10 = ssub.s32 1, %s8
  %s11 = scalar_select 0, %s10, %s8
  $region1: #{tpu_custom_call.1} parent=0
    #allocation2 [shape = 'u8[65536]{0}', space=vmem, size = 0x10000, scoped, tag = 'input window, operand 0']
    #allocation3 [shape = 's32[2]{0}', space=sflag, size = 0x8, scoped, tag = 'scoped memory for tpu_custom_call.1']
    #allocation4 [shape = 's32[2]{0}', space=sflag, size = 0x8, scoped, tag = 'scoped memory for tpu_custom_call.1']
    #allocation5 [shape = 'u8[32768]{0}', space=vmem, size = 0x8000, scoped, tag = 'input window, operand 1']
    #allocation6 [shape = 's32[2]{0}', space=sflag, size = 0x8, scoped, tag = 'scoped memory for tpu_custom_call.1']
    #allocation7 [shape = 'u8[32768]{0}', space=vmem, size = 0x8000, scoped, tag = 'input window, operand 2, single buffered']
    #allocation8 [shape = 'u8[32768]{0}', space=vmem, size = 0x8000, scoped, tag = 'input window, operand 3, single buffered']
    #allocation9 [shape = 's32[1]{0}', space=sflag, size = 0x4, scoped, tag = 'scoped memory for tpu_custom_call.1']
    #allocation10 [shape = 'u8[131072]{0}', space=vmem, size = 0x20000, scoped, tag = 'output window, operand 0']
    %12 = vsyncpa [#allocation3], 0
    %s13 = scalar_lea.sflag [#allocation3], 1
    %14 = vsyncpa %s13, 0
    %15 = vsyncpa [#allocation6], 0
    %s16 = scalar_lea.sflag [#allocation6], 1
    %17 = vsyncpa %s16, 0
    %18 = vsyncpa [#allocation9], 0
    %19 = vsyncpa [#allocation4], 0
    %s20 = scalar_lea.sflag [#allocation4], 1
    %21 = vsyncpa %s20, 0
    loop: start=0, step=1, limit=6
    $region2: #{tpu_custom_call.1} parent=1 // loop_pre_header
      _
    $region3: #{tpu_custom_call.1} parent=1 // loop_header
      %s23 = sphi 0, %s27
      %p24 = scmp.ge.s32.totalorder %s23, 6
      %s30 = sphi 0, %s42
      %s31 = sphi 0, %s38
      %s32 = sphi 0, %s30
      %s33 = sphi 0, %s31
      %s34 = sphi 0, %s32
      %s35 = sphi 0, %s33
      %s47 = sphi 0, %s49
      %s50 = sphi 0, %s47
      %s51 = sphi 0, %s50
      %s67 = sphi 0, %s51
      %s73 = sphi 0, %s75
      %s76 = sphi 0, %s73
      %s77 = sphi 0, %s76
      %s93 = sphi 0, %s77
      %s97 = sphi 0, %s97
      %s99 = sphi 0, %s97
      %s100 = sphi 0, %s99
      %s114 = sphi 0, %s100
      %s118 = sphi 0, %s118
      %s120 = sphi 0, %s118
      %s121 = sphi 0, %s120
      %s135 = sphi 0, %s121
      %s139 = sphi 0, %s139
      %s141 = sphi 0, %s139
      %s142 = sphi 0, %s141
      %s156 = sphi 0, %s142
      %s162 = sphi 0, %s164
      %s165 = sphi 0, %s162
      %s166 = sphi 0, %s165
      %s182 = sphi 0, %s166
      %s186 = sphi 0, %s186
      %s188 = sphi 0, %s186
      %s189 = sphi 0, %s188
      %s203 = sphi 0, %s189
      %s211 = sphi 0, %s213
      %s214 = sphi 0, %s211
      %s215 = sphi 0, %s214
      %s231 = sphi 0, %s215
    $region4: #{tpu_custom_call.1} parent=1 // loop_header_branch
      %26 = sbr.rel (%p24) target = $region8
    $region5: #{tpu_custom_call.1} parent=1 // loop_body
      %s28 = ssub.s32 %s23, 1
      %s29 = ssub.s32 %s23, 2
      %s36 = sadd.s32 1, %s31
      %p37 = scmp.ge.s32.totalorder %s36, 2
      %s38 = scalar_select %p37, 0, %s36
      %s39 = sadd.s32 1, %s30
      %s40 = scalar_select %p37, %s39, %s30
      %p41 = scmp.ge.s32.totalorder %s40, 2
      %s42 = scalar_select %p41, 0, %s40
      %s43 = ssub.s32 %s30, %s42
      %s44 = ssub.s32 %s31, %s38
      %s45 = sor.u32 %s43, %s44
      %p46 = scmp.eq.s32.totalorder %s45, 0
      %s48 = sadd.s32 %s47, 1
      %s49 = scalar_select %p46, %s47, %s48
      %p52 = pneg %p46
      %p53 = scmp.eq.s32.totalorder %s23, 3
      %p54 = por %p52, %p53
      %p55 = scmp.ne.s32.totalorder %s47, %s50
      %p56 = scmp.eq.s32.totalorder %s23, 0
      %p57 = por %p55, %p56
      %p58 = scmp.ne.s32.totalorder %s47, %s50
      %p59 = scmp.eq.s32.totalorder %s28, 3
      %p60 = por %p58, %p59
      %p61 = scmp.ne.s32.totalorder %s50, %s51
      %p62 = scmp.eq.s32.totalorder %s28, 0
      %p63 = por %p61, %p62
      %p64 = scmp.ne.s32.totalorder %s50, %s51
      %p65 = scmp.eq.s32.totalorder %s29, 3
      %p66 = por %p64, %p65
      %p68 = scmp.ne.s32.totalorder %s51, %s67
      %p69 = scmp.eq.s32.totalorder %s29, 0
      %p70 = por %p68, %p69
      %s71 = ssub.s32 %s30, %s42
      %p72 = scmp.eq.s32.totalorder %s71, 0
      %s74 = sadd.s32 %s73, 1
      %s75 = scalar_select %p72, %s73, %s74
      %p78 = pneg %p72
      %p79 = scmp.eq.s32.totalorder %s23, 3
      %p80 = por %p78, %p79
      %p81 = scmp.ne.s32.totalorder %s73, %s76
      %p82 = scmp.eq.s32.totalorder %s23, 0
      %p83 = por %p81, %p82
      %p84 = scmp.ne.s32.totalorder %s73, %s76
      %p85 = scmp.eq.s32.totalorder %s28, 3
      %p86 = por %p84, %p85
      %p87 = scmp.ne.s32.totalorder %s76, %s77
      %p88 = scmp.eq.s32.totalorder %s28, 0
      %p89 = por %p87, %p88
      %p90 = scmp.ne.s32.totalorder %s76, %s77
      %p91 = scmp.eq.s32.totalorder %s29, 3
      %p92 = por %p90, %p91
      %p94 = scmp.ne.s32.totalorder %s77, %s93
      %p95 = scmp.eq.s32.totalorder %s29, 0
      %p96 = por %p94, %p95
      %s98 = sadd.s32 %s97, 1
      %p101 = scmp.eq.s32.totalorder %s23, 3
      %p102 = scmp.ne.s32.totalorder %s97, %s99
      %p103 = scmp.eq.s32.totalorder %s23, 0
      %p104 = por %p102, %p103
      %p105 = scmp.ne.s32.totalorder %s97, %s99
      %p106 = scmp.eq.s32.totalorder %s28, 3
      %p107 = por %p105, %p106
      %p108 = scmp.ne.s32.totalorder %s99, %s100
      %p109 = scmp.eq.s32.totalorder %s28, 0
      %p110 = por %p108, %p109
      %p111 = scmp.ne.s32.totalorder %s99, %s100
      %p112 = scmp.eq.s32.totalorder %s29, 3
      %p113 = por %p111, %p112
      %p115 = scmp.ne.s32.totalorder %s100, %s114
      %p116 = scmp.eq.s32.totalorder %s29, 0
      %p117 = por %p115, %p116
      %s119 = sadd.s32 %s118, 1
      %p122 = scmp.eq.s32.totalorder %s23, 3
      %p123 = scmp.ne.s32.totalorder %s118, %s120
      %p124 = scmp.eq.s32.totalorder %s23, 0
      %p125 = por %p123, %p124
      %p126 = scmp.ne.s32.totalorder %s118, %s120
      %p127 = scmp.eq.s32.totalorder %s28, 3
      %p128 = por %p126, %p127
      %p129 = scmp.ne.s32.totalorder %s120, %s121
      %p130 = scmp.eq.s32.totalorder %s28, 0
      %p131 = por %p129, %p130
      %p132 = scmp.ne.s32.totalorder %s120, %s121
      %p133 = scmp.eq.s32.totalorder %s29, 3
      %p134 = por %p132, %p133
      %p136 = scmp.ne.s32.totalorder %s121, %s135
      %p137 = scmp.eq.s32.totalorder %s29, 0
      %p138 = por %p136, %p137
      %s140 = sadd.s32 %s139, 1
      %p143 = scmp.eq.s32.totalorder %s23, 3
      %p144 = scmp.ne.s32.totalorder %s139, %s141
      %p145 = scmp.eq.s32.totalorder %s23, 0
      %p146 = por %p144, %p145
      %p147 = scmp.ne.s32.totalorder %s139, %s141
      %p148 = scmp.eq.s32.totalorder %s28, 3
      %p149 = por %p147, %p148
      %p150 = scmp.ne.s32.totalorder %s141, %s142
      %p151 = scmp.eq.s32.totalorder %s28, 0
      %p152 = por %p150, %p151
      %p153 = scmp.ne.s32.totalorder %s141, %s142
      %p154 = scmp.eq.s32.totalorder %s29, 3
      %p155 = por %p153, %p154
      %p157 = scmp.ne.s32.totalorder %s142, %s156
      %p158 = scmp.eq.s32.totalorder %s29, 0
      %p159 = por %p157, %p158
      %s160 = ssub.s32 %s31, %s38
      %p161 = scmp.eq.s32.totalorder %s160, 0
      %s163 = sadd.s32 %s162, 1
      %s164 = scalar_select %p161, %s162, %s163
      %p167 = pneg %p161
      %p168 = scmp.eq.s32.totalorder %s23, 3
      %p169 = por %p167, %p168
      %p170 = scmp.ne.s32.totalorder %s162, %s165
      %p171 = scmp.eq.s32.totalorder %s23, 0
      %p172 = por %p170, %p171
      %p173 = scmp.ne.s32.totalorder %s162, %s165
      %p174 = scmp.eq.s32.totalorder %s28, 3
      %p175 = por %p173, %p174
      %p176 = scmp.ne.s32.totalorder %s165, %s166
      %p177 = scmp.eq.s32.totalorder %s28, 0
      %p178 = por %p176, %p177
      %p179 = scmp.ne.s32.totalorder %s165, %s166
      %p180 = scmp.eq.s32.totalorder %s29, 3
      %p181 = por %p179, %p180
      %p183 = scmp.ne.s32.totalorder %s166, %s182
      %p184 = scmp.eq.s32.totalorder %s29, 0
      %p185 = por %p183, %p184
      %s187 = sadd.s32 %s186, 1
      %p190 = scmp.eq.s32.totalorder %s23, 3
      %p191 = scmp.ne.s32.totalorder %s186, %s188
      %p192 = scmp.eq.s32.totalorder %s23, 0
      %p193 = por %p191, %p192
      %p194 = scmp.ne.s32.totalorder %s186, %s188
      %p195 = scmp.eq.s32.totalorder %s28, 3
      %p196 = por %p194, %p195
      %p197 = scmp.ne.s32.totalorder %s188, %s189
      %p198 = scmp.eq.s32.totalorder %s28, 0
      %p199 = por %p197, %p198
      %p200 = scmp.ne.s32.totalorder %s188, %s189
      %p201 = scmp.eq.s32.totalorder %s29, 3
      %p202 = por %p200, %p201
      %p204 = scmp.ne.s32.totalorder %s189, %s203
      %p205 = scmp.eq.s32.totalorder %s29, 0
      %p206 = por %p204, %p205
      %s207 = ssub.s32 %s30, %s42
      %s208 = ssub.s32 %s31, %s38
      %s209 = sor.u32 %s207, %s208
      %p210 = scmp.eq.s32.totalorder %s209, 0
      %s212 = sadd.s32 %s211, 1
      %s213 = scalar_select %p210, %s211, %s212
      %p216 = pneg %p210
      %p217 = scmp.eq.s32.totalorder %s23, 3
      %p218 = por %p216, %p217
      %p219 = scmp.ne.s32.totalorder %s211, %s214
      %p220 = scmp.eq.s32.totalorder %s23, 0
      %p221 = por %p219, %p220
      %p222 = scmp.ne.s32.totalorder %s211, %s214
      %p223 = scmp.eq.s32.totalorder %s28, 3
      %p224 = por %p222, %p223
      %p225 = scmp.ne.s32.totalorder %s214, %s215
      %p226 = scmp.eq.s32.totalorder %s28, 0
      %p227 = por %p225, %p226
      %p228 = scmp.ne.s32.totalorder %s214, %s215
      %p229 = scmp.eq.s32.totalorder %s29, 3
      %p230 = por %p228, %p229
      %p232 = scmp.ne.s32.totalorder %s215, %s231
      %p233 = scmp.eq.s32.totalorder %s29, 0
      %p234 = por %p232, %p233
      %p235 = scmp.le.s32.totalorder 1, %s23
      %p236 = scmp.lt.s32.totalorder %s23, 5
      %p237 = pnand %p235, %p236
      %p238 = pneg %p237
      // Predicated region
      $region9: #{tpu_custom_call.1} parent=5 // pred_check
        _
      $region10: #{tpu_custom_call.1} parent=5 // pred_check_branch
        %240 = sbr.rel (%p237) target = $region12
      $region11: #{tpu_custom_call.1} parent=5 // pred_region
        %s241 = ssub.s32 %s23, 1
        // Predicated region
        $region13: #{tpu_custom_call.1} parent=11 // pred_check
          %p242 = pneg %p110
        $region14: #{tpu_custom_call.1} parent=11 // pred_check_branch
          %244 = sbr.rel (%p242) target = $region16
        $region15: #{tpu_custom_call.1} parent=11 // pred_region
          %246 = vsyncadd [#allocation6], 0
          %s247 = sshll.u32 %s2, 4
          %s248 = int_to_ptr.hbm [resolvable:$true] %s247
          %s249 = sshll.u32 [#allocation7], 4
          %s250 = int_to_ptr.vmem [resolvable:$true] %s249
          %255 = dma.hbm_to_vmem [thread:$0]  %s248, 1024, %s250, [#allocation6], 64, 64, 4
        $region16: #{tpu_custom_call.1} parent=11 // pred_fallthru
          _
        // Predicated region
        $region17: #{tpu_custom_call.1} parent=11 // pred_check
          %p256 = pneg %p131
        $region18: #{tpu_custom_call.1} parent=11 // pred_check_branch
          %258 = sbr.rel (%p256) target = $region20
        $region19: #{tpu_custom_call.1} parent=11 // pred_region
          %260 = vsyncadd [#allocation9], 0
          %s261 = sshll.u32 %s3, 4
          %s262 = int_to_ptr.hbm [resolvable:$true] %s261
          %s263 = sshll.u32 [#allocation8], 4
          %s264 = int_to_ptr.vmem [resolvable:$true] %s263
          %269 = dma.hbm_to_vmem [thread:$0]  %s262, 1024, %s264, [#allocation9], 64, 64, 4
        $region20: #{tpu_custom_call.1} parent=11 // pred_fallthru
          _
        // Predicated region
        $region21: #{tpu_custom_call.1} parent=11 // pred_check
          %p270 = pneg %p152
        $region22: #{tpu_custom_call.1} parent=11 // pred_check_branch
          %272 = sbr.rel (%p270) target = $region24
        $region23: #{tpu_custom_call.1} parent=11 // pred_region
          _
        $region24: #{tpu_custom_call.1} parent=11 // pred_fallthru
          _
        // Predicated region
        $region25: #{tpu_custom_call.1} parent=11 // pred_check
          %p273 = pneg %p199
        $region26: #{tpu_custom_call.1} parent=11 // pred_check_branch
          %275 = sbr.rel (%p273) target = $region28
        $region27: #{tpu_custom_call.1} parent=11 // pred_region
          _
        $region28: #{tpu_custom_call.1} parent=11 // pred_fallthru
          _
      $region12: #{tpu_custom_call.1} parent=5 // pred_fallthru
        _
      %p276 = scmp.lt.s32.totalorder %s23, 4
      // Predicated region
      $region29: #{tpu_custom_call.1} parent=5 // pred_check
        %p277 = pneg %p276
      $region30: #{tpu_custom_call.1} parent=5 // pred_check_branch
        %279 = sbr.rel (%p277) target = $region32
      $region31: #{tpu_custom_call.1} parent=5 // pred_region
        // Predicated region
        $region33: #{tpu_custom_call.1} parent=31 // pred_check
          %p280 = pneg %p57
        $region34: #{tpu_custom_call.1} parent=31 // pred_check_branch
          %282 = sbr.rel (%p280) target = $region36
        $region35: #{tpu_custom_call.1} parent=31 // pred_region
          %s283 = sand.u32 %s47, 1
          %s284 = scalar_lea.sflag [#allocation3], %s283
          %s285 = sand.u32 %s47, 1
          %s286 = smul.addr %s285, 64
          %s287 = scalar_lea.vmem [#allocation2], %s286
          %s288 = smul.u32 16, %s31
          %290 = vsyncadd %s284, 0
          %s291 = smul.addr %s30, 32
          %s292 = sadd.s32 %s288, %s291
          %s293 = smul.addr %s292, 4
          %s294 = scalar_lea.hbm %s0, %s293
          %s295 = sshll.u32 %s294, 4
          %s296 = int_to_ptr.hbm [resolvable:$true] %s295
          %s297 = sshll.u32 %s287, 4
          %s298 = int_to_ptr.vmem [resolvable:$true] %s297
          %303 = dma.hbm_to_vmem [thread:$0]  %s296, 1024, %s298, %s284, 64, 64, 4
        $region36: #{tpu_custom_call.1} parent=31 // pred_fallthru
          _
        // Predicated region
        $region37: #{tpu_custom_call.1} parent=31 // pred_check
          %p304 = pneg %p83
        $region38: #{tpu_custom_call.1} parent=31 // pred_check_branch
          %306 = sbr.rel (%p304) target = $region40
        $region39: #{tpu_custom_call.1} parent=31 // pred_region
          %s307 = sand.u32 %s23, 1
          %s308 = scalar_lea.sflag [#allocation6], %s307
          %s309 = sand.u32 %s73, 1
          %s310 = smul.addr %s309, 32
          %s311 = scalar_lea.vmem [#allocation5], %s310
          %313 = vsyncadd %s308, 0
          %s314 = smul.addr %s30, 8
          %s315 = smul.addr %s314, 4
          %s316 = scalar_lea.hbm %s1, %s315
          %s318 = sshll.u32 %s316, 4
          %s319 = int_to_ptr.hbm [resolvable:$true] %s318
          %s320 = sshll.u32 %s311, 4
          %s321 = int_to_ptr.vmem [resolvable:$true] %s320
          %323 = dma.hbm_to_vmem [thread:$0]  %s319, 512, %s321, %s308
        $region40: #{tpu_custom_call.1} parent=31 // pred_fallthru
          _
        // Predicated region
        $region41: #{tpu_custom_call.1} parent=31 // pred_check
          %p324 = pneg %p172
        $region42: #{tpu_custom_call.1} parent=31 // pred_check_branch
          %326 = sbr.rel (%p324) target = $region44
        $region43: #{tpu_custom_call.1} parent=31 // pred_region
          %p327 = scmp.lt.s32.totalorder %s31, 1
          %s328 = scalar_select %p327, %s31, 1
          %s329 = smul.addr %s328, 8
          %s330 = scalar_lea.vmem %s5, %s329
        $region44: #{tpu_custom_call.1} parent=31 // pred_fallthru
          _
      $region32: #{tpu_custom_call.1} parent=5 // pred_fallthru
        _
      %p331 = scmp.le.s32.totalorder 1, %s23
      %p332 = scmp.lt.s32.totalorder %s23, 5
      %p333 = pnand %p331, %p332
      %p334 = pneg %p333
      // Predicated region
      $region45: #{tpu_custom_call.1} parent=5 // pred_check
        _
      $region46: #{tpu_custom_call.1} parent=5 // pred_check_branch
        %336 = sbr.rel (%p333) target = $region48
      $region47: #{tpu_custom_call.1} parent=5 // pred_region
        %s337 = ssub.s32 %s23, 1
        %s338 = sand.u32 %s50, 1
        %s339 = scalar_lea.sflag [#allocation3], %s338
        %s340 = sand.u32 %s50, 1
        %s341 = smul.addr %s340, 64
        %s342 = scalar_lea.vmem [#allocation2], %s341
        // Predicated region
        $region49: #{tpu_custom_call.1} parent=47 // pred_check
          %p343 = pneg %p63
        $region50: #{tpu_custom_call.1} parent=47 // pred_check_branch
          %345 = sbr.rel (%p343) target = $region52
        $region51: #{tpu_custom_call.1} parent=47 // pred_region
          %347 = dma.done %s339, 1024
        $region52: #{tpu_custom_call.1} parent=47 // pred_fallthru
          _
        %s348 = sand.u32 %s28, 1
        %s349 = scalar_lea.sflag [#allocation6], %s348
        %s350 = sand.u32 %s76, 1
        %s351 = smul.addr %s350, 32
        %s352 = scalar_lea.vmem [#allocation5], %s351
        // Predicated region
        $region53: #{tpu_custom_call.1} parent=47 // pred_check
          %p353 = pneg %p89
        $region54: #{tpu_custom_call.1} parent=47 // pred_check_branch
          %355 = sbr.rel (%p353) target = $region56
        $region55: #{tpu_custom_call.1} parent=47 // pred_region
          %357 = dma.done %s349, 512
        $region56: #{tpu_custom_call.1} parent=47 // pred_fallthru
          _
        // Predicated region
        $region57: #{tpu_custom_call.1} parent=47 // pred_check
          %p358 = pneg %p110
        $region58: #{tpu_custom_call.1} parent=47 // pred_check_branch
          %360 = sbr.rel (%p358) target = $region60
        $region59: #{tpu_custom_call.1} parent=47 // pred_region
          %362 = dma.done [#allocation6], 1024
        $region60: #{tpu_custom_call.1} parent=47 // pred_fallthru
          _
        // Predicated region
        $region61: #{tpu_custom_call.1} parent=47 // pred_check
          %p363 = pneg %p131
        $region62: #{tpu_custom_call.1} parent=47 // pred_check_branch
          %365 = sbr.rel (%p363) target = $region64
        $region63: #{tpu_custom_call.1} parent=47 // pred_region
          %367 = dma.done [#allocation9], 1024
        $region64: #{tpu_custom_call.1} parent=47 // pred_fallthru
          _
        %s368 = sand.u32 %s50, 1
        %s369 = scalar_lea.sflag [#allocation3], %s368
        %s370 = sand.u32 %s50, 1
        %s371 = smul.addr %s370, 64
        %s372 = scalar_lea.vmem [#allocation2], %s371
        %p373 = pneg %p63
        %p374 = pneg %p60
        %s375 = sand.u32 %s28, 1
        %s376 = scalar_lea.sflag [#allocation6], %s375
        %s377 = sand.u32 %s76, 1
        %s378 = smul.addr %s377, 32
        %s379 = scalar_lea.vmem [#allocation5], %s378
        %p380 = pneg %p89
        %p381 = pneg %p86
        %p382 = pneg %p110
        %p383 = pneg %p107
        %p384 = pneg %p131
        %p385 = pneg %p128
        %p386 = pneg %p152
        %p387 = pneg %p149
        %p388 = scmp.lt.s32.totalorder %s33, 1
        %s389 = scalar_select %p388, %s33, 1
        %s390 = smul.addr %s389, 8
        %s391 = scalar_lea.vmem %s5, %s390
        %p392 = pneg %p178
        %p393 = pneg %p175
        %p394 = pneg %p199
        %p395 = pneg %p196
        %p396 = pneg %p227
        %p397 = pneg %p224
        %s398 = sand.u32 %s214, 1
        %s399 = scalar_lea.sflag [#allocation4], %s398
        %s400 = sand.u32 %s214, 1
        %s401 = smul.addr %s400, 128
        %s402 = scalar_lea.vmem [#allocation10], %s401
        %s403 = smul.u32 16, %s33
        %p404 = scmp.lt.s32.totalorder %s33, 1
        %s405 = scalar_select %p404, %s33, 1
        %s406 = smul.addr %s405, 8
        %s407 = scalar_lea.vmem %s5, %s406
        %s408 = smul.u32 16, %s33
        %v410 = vld [vmem:[%s407] sm:$0xff]
        %v411 = vpack.c.bf16 %v410, %v410
        %v412 = vld [vmem:[%s6] sm:$0xff]
        %v413 = vld [vmem:[%s6 + $0x8] sm:$0xff]
        %v414 = vpack.c.bf16 %v412, %v412
        %v415 = vpack.c.bf16 %v413, %v413
        %v416 = vld [vmem:[%s352] sm:$0xff]
        %v417 = vld [vmem:[%s352 + $0x8] sm:$0xff]
        %v418 = vld [vmem:[%s352 + $0x10] sm:$0xff]
        %v419 = vld [vmem:[%s352 + $0x18] sm:$0xff]
        %v424 = vunpack.c.l.b16 %v416
        %v425 = vunpack.c.h.b16 %v416
        %v426 = vunpack.c.l.b16 %v417
        %v427 = vunpack.c.h.b16 %v417
        %v428 = vunpack.c.l.b16 %v418
        %v429 = vunpack.c.h.b16 %v418
        %v430 = vunpack.c.l.b16 %v419
        %v431 = vunpack.c.h.b16 %v419
        %v432 = vpack.c.b16 %v424, %v424
        %v433 = vpack.c.b16 %v425, %v425
        %v434 = vpack.c.b16 %v426, %v426
        %v435 = vpack.c.b16 %v427, %v427
        %v436 = vpack.c.b16 %v428, %v428
        %v437 = vpack.c.b16 %v429, %v429
        %v438 = vpack.c.b16 %v430, %v430
        %v439 = vpack.c.b16 %v431, %v431
        %vm440 = vcmask 64512
        %v442 = vsel %vm440, %v411, 0
        %vm444 = vcmask 1043456
        %v446 = vsel %vm444, %v432, 0
        %v449 = vsel %vm444, %v433, 0
        %v452 = vsel %vm444, %v434, 0
        %v455 = vsel %vm444, %v435, 0
        %v458 = vsel %vm444, %v436, 0
        %v461 = vsel %vm444, %v437, 0
        %v464 = vsel %vm444, %v438, 0
        %v467 = vsel %vm444, %v439, 0
        %469 = vmatpush.bf16.msra.mxu0 0
        %470 = vmatpush.bf16.msra.mxu0 0
        %471 = vmatpush.bf16.msra.mxu0 0
        %472 = vmatpush.bf16.msra.mxu0 0
        %473 = vmatpush.bf16.msra.mxu0 0
        %474 = vmatpush.bf16.msra.mxu0 0
        %475 = vmatpush.bf16.msra.mxu0 0
        %476 = vmatpush.bf16.msra.mxu0 %v446
        %477 = vmatmul.bf16.gmra.mxu0 %v442
        %v478 = vpop.f32.mrf.mxu0
        %v479 = vadd.f32 0.0, %v478
        %v480 = vpop.f32.mrf.mxu0
        %481 = vdwg.mxu0
        %482 = vmatpush.bf16.msra.mxu0 0
        %483 = vmatpush.bf16.msra.mxu0 0
        %484 = vmatpush.bf16.msra.mxu0 0
        %485 = vmatpush.bf16.msra.mxu0 0
        %486 = vmatpush.bf16.msra.mxu0 0
        %487 = vmatpush.bf16.msra.mxu0 0
        %488 = vmatpush.bf16.msra.mxu0 0
        %489 = vmatpush.bf16.msra.mxu0 %v449
        %490 = vmatmul.bf16.gmra.mxu0 %v442
        %v491 = vpop.f32.mrf.mxu0
        %v492 = vadd.f32 0.0, %v491
        %v493 = vpop.f32.mrf.mxu0
        %494 = vdwg.mxu0
        %495 = vmatpush.bf16.msra.mxu0 0
        %496 = vmatpush.bf16.msra.mxu0 0
        %497 = vmatpush.bf16.msra.mxu0 0
        %498 = vmatpush.bf16.msra.mxu0 0
        %499 = vmatpush.bf16.msra.mxu0 0
        %500 = vmatpush.bf16.msra.mxu0 0
        %501 = vmatpush.bf16.msra.mxu0 0
        %502 = vmatpush.bf16.msra.mxu0 %v452
        %503 = vmatmul.bf16.gmra.mxu0 %v442
        %v504 = vpop.f32.mrf.mxu0
        %v505 = vadd.f32 0.0, %v504
        %v506 = vpop.f32.mrf.mxu0
        %507 = vdwg.mxu0
        %508 = vmatpush.bf16.msra.mxu0 0
        %509 = vmatpush.bf16.msra.mxu0 0
        %510 = vmatpush.bf16.msra.mxu0 0
        %511 = vmatpush.bf16.msra.mxu0 0
        %512 = vmatpush.bf16.msra.mxu0 0
        %513 = vmatpush.bf16.msra.mxu0 0
        %514 = vmatpush.bf16.msra.mxu0 0
        %515 = vmatpush.bf16.msra.mxu0 %v455
        %516 = vmatmul.bf16.gmra.mxu0 %v442
        %v517 = vpop.f32.mrf.mxu0
        %v518 = vadd.f32 0.0, %v517
        %v519 = vpop.f32.mrf.mxu0
        %520 = vdwg.mxu0
        %521 = vmatpush.bf16.msra.mxu0 0
        %522 = vmatpush.bf16.msra.mxu0 0
        %523 = vmatpush.bf16.msra.mxu0 0
        %524 = vmatpush.bf16.msra.mxu0 0
        %525 = vmatpush.bf16.msra.mxu0 0
        %526 = vmatpush.bf16.msra.mxu0 0
        %527 = vmatpush.bf16.msra.mxu0 0
        %528 = vmatpush.bf16.msra.mxu0 %v458
        %529 = vmatmul.bf16.gmra.mxu0 %v442
        %v530 = vpop.f32.mrf.mxu0
        %v531 = vadd.f32 0.0, %v530
        %v532 = vpop.f32.mrf.mxu0
        %533 = vdwg.mxu0
        %534 = vmatpush.bf16.msra.mxu0 0
        %535 = vmatpush.bf16.msra.mxu0 0
        %536 = vmatpush.bf16.msra.mxu0 0
        %537 = vmatpush.bf16.msra.mxu0 0
        %538 = vmatpush.bf16.msra.mxu0 0
        %539 = vmatpush.bf16.msra.mxu0 0
        %540 = vmatpush.bf16.msra.mxu0 0
        %541 = vmatpush.bf16.msra.mxu0 %v461
        %542 = vmatmul.bf16.gmra.mxu0 %v442
        %v543 = vpop.f32.mrf.mxu0
        %v544 = vadd.f32 0.0, %v543
        %v545 = vpop.f32.mrf.mxu0
        %546 = vdwg.mxu0
        %547 = vmatpush.bf16.msra.mxu0 0
        %548 = vmatpush.bf16.msra.mxu0 0
        %549 = vmatpush.bf16.msra.mxu0 0
        %550 = vmatpush.bf16.msra.mxu0 0
        %551 = vmatpush.bf16.msra.mxu0 0
        %552 = vmatpush.bf16.msra.mxu0 0
        %553 = vmatpush.bf16.msra.mxu0 0
        %554 = vmatpush.bf16.msra.mxu0 %v464
        %555 = vmatmul.bf16.gmra.mxu0 %v442
        %v556 = vpop.f32.mrf.mxu0
        %v557 = vadd.f32 0.0, %v556
        %v558 = vpop.f32.mrf.mxu0
        %559 = vdwg.mxu0
        %560 = vmatpush.bf16.msra.mxu0 0
        %561 = vmatpush.bf16.msra.mxu0 0
        %562 = vmatpush.bf16.msra.mxu0 0
        %563 = vmatpush.bf16.msra.mxu0 0
        %564 = vmatpush.bf16.msra.mxu0 0
        %565 = vmatpush.bf16.msra.mxu0 0
        %566 = vmatpush.bf16.msra.mxu0 0
        %567 = vmatpush.bf16.msra.mxu0 %v467
        %568 = vmatmul.bf16.gmra.mxu0 %v442
        %v569 = vpop.f32.mrf.mxu0
        %v570 = vadd.f32 0.0, %v569
        %v571 = vpop.f32.mrf.mxu0
        %572 = vdwg.mxu0
        %v581 = vrot.slane %v492, 7
        %v582 = vrot.slane %v505, 6
        %v583 = vrot.slane %v518, 5
        %v584 = vrot.slane %v531, 4
        %v585 = vrot.slane %v544, 3
        %v586 = vrot.slane %v557, 2
        %v587 = vrot.slane %v570, 1
        %vm588 = vcmask 1040384
        %v589 = vsel %vm588, %v479, %v581
        %vm590 = vcmask 1042434
        %v591 = vsel %vm590, %v582, %v583
        %vm592 = vcmask 1041408
        %v593 = vsel %vm592, %v589, %v591
        %vm594 = vcmask 1044484
        %v595 = vsel %vm594, %v584, %v585
        %vm596 = vcmask 1046534
        %v597 = vsel %vm596, %v586, %v587
        %vm598 = vcmask 1045508
        %v599 = vsel %vm598, %v595, %v597
        %v600 = vsel %vm444, %v593, %v599
        %vm601 = vcmask 1041409
        %v602 = vsel %vm601, %v479, %v581
        %vm603 = vcmask 1043459
        %v604 = vsel %vm603, %v582, %v583
        %vm605 = vcmask 1042433
        %v606 = vsel %vm605, %v602, %v604
        %vm607 = vcmask 1045509
        %v608 = vsel %vm607, %v584, %v585
        %vm609 = vcmask 1046528
        %v610 = vsel %vm609, %v587, %v586
        %vm611 = vcmask 1046533
        %v612 = vsel %vm611, %v608, %v610
        %vm613 = vcmask 1044481
        %v614 = vsel %vm613, %v606, %v612
        %v615 = vrot.slane %v614, 1
        %v616 = vsel %vm590, %v479, %v581
        %v617 = vsel %vm594, %v582, %v583
        %vm618 = vcmask 1043458
        %v619 = vsel %vm618, %v616, %v617
        %v620 = vsel %vm596, %v584, %v585
        %v621 = vsel %vm588, %v586, %v587
        %vm622 = vcmask 1045504
        %v623 = vsel %vm622, %v621, %v620
        %vm624 = vcmask 1045506
        %v625 = vsel %vm624, %v619, %v623
        %v626 = vrot.slane %v625, 2
        %v627 = vsel %vm603, %v479, %v581
        %v628 = vsel %vm607, %v582, %v583
        %vm629 = vcmask 1044483
        %v630 = vsel %vm629, %v627, %v628
        %v631 = vsel %vm609, %v585, %v584
        %v632 = vsel %vm601, %v586, %v587
        %vm633 = vcmask 1046529
        %v634 = vsel %vm633, %v632, %v631
        %vm635 = vcmask 1046531
        %v636 = vsel %vm635, %v630, %v634
        %v637 = vrot.slane %v636, 3
        %v638 = vsel %vm594, %v479, %v581
        %v639 = vsel %vm596, %v582, %v583
        %v640 = vsel %vm598, %v638, %v639
        %v641 = vsel %vm588, %v584, %v585
        %v642 = vsel %vm590, %v586, %v587
        %v643 = vsel %vm592, %v641, %v642
        %v644 = vsel %vm444, %v643, %v640
        %v645 = vrot.slane %v644, 4
        %v646 = vsel %vm607, %v479, %v581
        %v647 = vsel %vm609, %v583, %v582
        %v648 = vsel %vm611, %v646, %v647
        %v649 = vsel %vm601, %v584, %v585
        %v650 = vsel %vm603, %v586, %v587
        %v651 = vsel %vm605, %v649, %v650
        %v652 = vsel %vm613, %v651, %v648
        %v653 = vrot.slane %v652, 5
        %v654 = vsel %vm596, %v479, %v581
        %v655 = vsel %vm588, %v582, %v583
        %v656 = vsel %vm622, %v655, %v654
        %v657 = vsel %vm590, %v584, %v585
        %v658 = vsel %vm594, %v586, %v587
        %v659 = vsel %vm618, %v657, %v658
        %v660 = vsel %vm624, %v659, %v656
        %v661 = vrot.slane %v660, 6
        %v662 = vsel %vm609, %v581, %v479
        %v663 = vsel %vm601, %v582, %v583
        %v664 = vsel %vm633, %v663, %v662
        %v665 = vsel %vm603, %v584, %v585
        %v666 = vsel %vm607, %v586, %v587
        %v667 = vsel %vm629, %v665, %v666
        %v668 = vsel %vm635, %v667, %v664
        %v669 = vrot.slane %v668, 7
        %v678 = vpack.c.bf16 %v615, %v600
        %v679 = vpack.c.bf16 %v637, %v626
        %v680 = vpack.c.bf16 %v653, %v645
        %v681 = vpack.c.bf16 %v669, %v661
        %v682 = vld [vmem:[#allocation8] sm:$0xf]
        %v683 = vld [vmem:[#allocation8 + $0x4] sm:$0xf]
        %v684 = vld [vmem:[#allocation8 + $0x8] sm:$0xf]
        %v685 = vld [vmem:[#allocation8 + $0xc] sm:$0xf]
        %v686 = vld [vmem:[#allocation8 + $0x10] sm:$0xf]
        %v687 = vld [vmem:[#allocation8 + $0x14] sm:$0xf]
        %v688 = vld [vmem:[#allocation8 + $0x18] sm:$0xf]
        %v689 = vld [vmem:[#allocation8 + $0x1c] sm:$0xf]
        %v690 = vld [vmem:[#allocation8 + $0x20] sm:$0xf]
        %v691 = vld [vmem:[#allocation8 + $0x24] sm:$0xf]
        %v692 = vld [vmem:[#allocation8 + $0x28] sm:$0xf]
        %v693 = vld [vmem:[#allocation8 + $0x2c] sm:$0xf]
        %v694 = vld [vmem:[#allocation8 + $0x30] sm:$0xf]
        %v695 = vld [vmem:[#allocation8 + $0x34] sm:$0xf]
        %v696 = vld [vmem:[#allocation8 + $0x38] sm:$0xf]
        %v697 = vld [vmem:[#allocation8 + $0x3c] sm:$0xf]
        %v714 = vunpack.c.l.b16 %v682
        %v715 = vunpack.c.l.b16 %v683
        %v716 = vunpack.c.l.b16 %v684
        %v717 = vunpack.c.l.b16 %v685
        %v718 = vunpack.c.l.b16 %v686
        %v719 = vunpack.c.l.b16 %v687
        %v720 = vunpack.c.l.b16 %v688
        %v721 = vunpack.c.l.b16 %v689
        %v722 = vunpack.c.l.b16 %v690
        %v723 = vunpack.c.l.b16 %v691
        %v724 = vunpack.c.l.b16 %v692
        %v725 = vunpack.c.l.b16 %v693
        %v726 = vunpack.c.l.b16 %v694
        %v727 = vunpack.c.l.b16 %v695
        %v728 = vunpack.c.l.b16 %v696
        %v729 = vunpack.c.l.b16 %v697
        %v730 = vpack.c.b16 %v715, %v714
        %v731 = vpack.c.b16 %v717, %v716
        %v732 = vpack.c.b16 %v719, %v718
        %v733 = vpack.c.b16 %v721, %v720
        %v734 = vpack.c.b16 %v723, %v722
        %v735 = vpack.c.b16 %v725, %v724
        %v736 = vpack.c.b16 %v727, %v726
        %v737 = vpack.c.b16 %v729, %v728
        %746 = vmatpush.bf16.msra.mxu0 %v737
        %747 = vmatpush.bf16.msra.mxu0 %v736
        %748 = vmatpush.bf16.msra.mxu0 %v735
        %749 = vmatpush.bf16.msra.mxu0 %v734
        %750 = vmatpush.bf16.msra.mxu0 %v733
        %751 = vmatpush.bf16.msra.mxu0 %v732
        %752 = vmatpush.bf16.msra.mxu0 %v731
        %753 = vmatpush.bf16.msra.mxu0 %v730
        %754 = vmatmul.bf16.gmra.mxu0 %v678
        %v755 = vpop.f32.mrf.mxu0
        %v756 = vadd.f32 0.0, %v755
        %v757 = vpop.f32.mrf.mxu0
        %v758 = vadd.f32 0.0, %v757
        %759 = vmatmul.bf16.gmra.mxu0 %v679
        %v760 = vpop.f32.mrf.mxu0
        %v761 = vadd.f32 0.0, %v760
        %v762 = vpop.f32.mrf.mxu0
        %v763 = vadd.f32 0.0, %v762
        %764 = vmatmul.bf16.gmra.mxu0 %v680
        %v765 = vpop.f32.mrf.mxu0
        %v766 = vadd.f32 0.0, %v765
        %v767 = vpop.f32.mrf.mxu0
        %v768 = vadd.f32 0.0, %v767
        %769 = vmatmul.bf16.gmra.mxu0 %v681
        %v770 = vpop.f32.mrf.mxu0
        %v771 = vadd.f32 0.0, %v770
        %v772 = vpop.f32.mrf.mxu0
        %v773 = vadd.f32 0.0, %v772
        %774 = vdwg.mxu0
        %v775 = vpack.c.bf16 %v756, %v756
        %v776 = vpack.c.bf16 %v758, %v758
        %v777 = vpack.c.bf16 %v761, %v761
        %v778 = vpack.c.bf16 %v763, %v763
        %v779 = vpack.c.bf16 %v766, %v766
        %v780 = vpack.c.bf16 %v768, %v768
        %v781 = vpack.c.bf16 %v771, %v771
        %v782 = vpack.c.bf16 %v773, %v773
        %v785 = vunpack.c.l.b16 %v414
        %v786 = vunpack.c.l.b16 %v415
        %v787 = vpack.c.b16 %v786, %v785
        %v789 = vsel %vm440, %v787, 0
        %v792 = vsel %vm444, %v775, 0
        %794 = vmatpush.bf16.msra.mxu0 0
        %795 = vmatpush.bf16.msra.mxu0 0
        %796 = vmatpush.bf16.msra.mxu0 0
        %797 = vmatpush.bf16.msra.mxu0 0
        %798 = vmatpush.bf16.msra.mxu0 0
        %799 = vmatpush.bf16.msra.mxu0 0
        %800 = vmatpush.bf16.msra.mxu0 0
        %801 = vmatpush.bf16.msra.mxu0 %v792
        %802 = vmatmul.bf16.gmra.mxu0 %v789
        %v803 = vpop.f32.mrf.mxu0
        %v804 = vadd.f32 0.0, %v803
        %v805 = vpop.f32.mrf.mxu0
        %v806 = vadd.f32 0.0, %v805
        %807 = vdwg.mxu0
        %v809 = vsel %vm444, %v776, 0
        %811 = vmatpush.bf16.msra.mxu0 0
        %812 = vmatpush.bf16.msra.mxu0 0
        %813 = vmatpush.bf16.msra.mxu0 0
        %814 = vmatpush.bf16.msra.mxu0 0
        %815 = vmatpush.bf16.msra.mxu0 0
        %816 = vmatpush.bf16.msra.mxu0 0
        %817 = vmatpush.bf16.msra.mxu0 0
        %818 = vmatpush.bf16.msra.mxu0 %v809
        %819 = vmatmul.bf16.gmra.mxu0 %v789
        %v820 = vpop.f32.mrf.mxu0
        %v821 = vadd.f32 0.0, %v820
        %v822 = vpop.f32.mrf.mxu0
        %v823 = vadd.f32 0.0, %v822
        %824 = vdwg.mxu0
        %v826 = vsel %vm444, %v777, 0
        %828 = vmatpush.bf16.msra.mxu0 0
        %829 = vmatpush.bf16.msra.mxu0 0
        %830 = vmatpush.bf16.msra.mxu0 0
        %831 = vmatpush.bf16.msra.mxu0 0
        %832 = vmatpush.bf16.msra.mxu0 0
        %833 = vmatpush.bf16.msra.mxu0 0
        %834 = vmatpush.bf16.msra.mxu0 0
        %835 = vmatpush.bf16.msra.mxu0 %v826
        %836 = vmatmul.bf16.gmra.mxu0 %v789
        %v837 = vpop.f32.mrf.mxu0
        %v838 = vadd.f32 0.0, %v837
        %v839 = vpop.f32.mrf.mxu0
        %v840 = vadd.f32 0.0, %v839
        %841 = vdwg.mxu0
        %v843 = vsel %vm444, %v778, 0
        %845 = vmatpush.bf16.msra.mxu0 0
        %846 = vmatpush.bf16.msra.mxu0 0
        %847 = vmatpush.bf16.msra.mxu0 0
        %848 = vmatpush.bf16.msra.mxu0 0
        %849 = vmatpush.bf16.msra.mxu0 0
        %850 = vmatpush.bf16.msra.mxu0 0
        %851 = vmatpush.bf16.msra.mxu0 0
        %852 = vmatpush.bf16.msra.mxu0 %v843
        %853 = vmatmul.bf16.gmra.mxu0 %v789
        %v854 = vpop.f32.mrf.mxu0
        %v855 = vadd.f32 0.0, %v854
        %v856 = vpop.f32.mrf.mxu0
        %v857 = vadd.f32 0.0, %v856
        %858 = vdwg.mxu0
        %v860 = vsel %vm444, %v779, 0
        %862 = vmatpush.bf16.msra.mxu0 0
        %863 = vmatpush.bf16.msra.mxu0 0
        %864 = vmatpush.bf16.msra.mxu0 0
        %865 = vmatpush.bf16.msra.mxu0 0
        %866 = vmatpush.bf16.msra.mxu0 0
        %867 = vmatpush.bf16.msra.mxu0 0
        %868 = vmatpush.bf16.msra.mxu0 0
        %869 = vmatpush.bf16.msra.mxu0 %v860
        %870 = vmatmul.bf16.gmra.mxu0 %v789
        %v871 = vpop.f32.mrf.mxu0
        %v872 = vadd.f32 0.0, %v871
        %v873 = vpop.f32.mrf.mxu0
        %v874 = vadd.f32 0.0, %v873
        %875 = vdwg.mxu0
        %v877 = vsel %vm444, %v780, 0
        %879 = vmatpush.bf16.msra.mxu0 0
        %880 = vmatpush.bf16.msra.mxu0 0
        %881 = vmatpush.bf16.msra.mxu0 0
        %882 = vmatpush.bf16.msra.mxu0 0
        %883 = vmatpush.bf16.msra.mxu0 0
        %884 = vmatpush.bf16.msra.mxu0 0
        %885 = vmatpush.bf16.msra.mxu0 0
        %886 = vmatpush.bf16.msra.mxu0 %v877
        %887 = vmatmul.bf16.gmra.mxu0 %v789
        %v888 = vpop.f32.mrf.mxu0
        %v889 = vadd.f32 0.0, %v888
        %v890 = vpop.f32.mrf.mxu0
        %v891 = vadd.f32 0.0, %v890
        %892 = vdwg.mxu0
        %v894 = vsel %vm444, %v781, 0
        %896 = vmatpush.bf16.msra.mxu0 0
        %897 = vmatpush.bf16.msra.mxu0 0
        %898 = vmatpush.bf16.msra.mxu0 0
        %899 = vmatpush.bf16.msra.mxu0 0
        %900 = vmatpush.bf16.msra.mxu0 0
        %901 = vmatpush.bf16.msra.mxu0 0
        %902 = vmatpush.bf16.msra.mxu0 0
        %903 = vmatpush.bf16.msra.mxu0 %v894
        %904 = vmatmul.bf16.gmra.mxu0 %v789
        %v905 = vpop.f32.mrf.mxu0
        %v906 = vadd.f32 0.0, %v905
        %v907 = vpop.f32.mrf.mxu0
        %v908 = vadd.f32 0.0, %v907
        %909 = vdwg.mxu0
        %v911 = vsel %vm444, %v782, 0
        %913 = vmatpush.bf16.msra.mxu0 0
        %914 = vmatpush.bf16.msra.mxu0 0
        %915 = vmatpush.bf16.msra.mxu0 0
        %916 = vmatpush.bf16.msra.mxu0 0
        %917 = vmatpush.bf16.msra.mxu0 0
        %918 = vmatpush.bf16.msra.mxu0 0
        %919 = vmatpush.bf16.msra.mxu0 0
        %920 = vmatpush.bf16.msra.mxu0 %v911
        %921 = vmatmul.bf16.gmra.mxu0 %v789
        %v922 = vpop.f32.mrf.mxu0
        %v923 = vadd.f32 0.0, %v922
        %v924 = vpop.f32.mrf.mxu0
        %v925 = vadd.f32 0.0, %v924
        %926 = vdwg.mxu0
        %v927 = vld [vmem:[%s342] sm:$0xf]
        %v928 = vld [vmem:[%s342 + $0x4] sm:$0xf]
        %v929 = vld [vmem:[%s342 + $0x8] sm:$0xf]
        %v930 = vld [vmem:[%s342 + $0xc] sm:$0xf]
        %v931 = vld [vmem:[%s342 + $0x10] sm:$0xf]
        %v932 = vld [vmem:[%s342 + $0x14] sm:$0xf]
        %v933 = vld [vmem:[%s342 + $0x18] sm:$0xf]
        %v934 = vld [vmem:[%s342 + $0x1c] sm:$0xf]
        %v935 = vld [vmem:[%s342 + $0x20] sm:$0xf]
        %v936 = vld [vmem:[%s342 + $0x24] sm:$0xf]
        %v937 = vld [vmem:[%s342 + $0x28] sm:$0xf]
        %v938 = vld [vmem:[%s342 + $0x2c] sm:$0xf]
        %v939 = vld [vmem:[%s342 + $0x30] sm:$0xf]
        %v940 = vld [vmem:[%s342 + $0x34] sm:$0xf]
        %v941 = vld [vmem:[%s342 + $0x38] sm:$0xf]
        %v942 = vld [vmem:[%s342 + $0x3c] sm:$0xf]
        %v943 = vld [vmem:[#allocation7] sm:$0xf]
        %v944 = vld [vmem:[#allocation7 + $0x4] sm:$0xf]
        %v945 = vld [vmem:[#allocation7 + $0x8] sm:$0xf]
        %v946 = vld [vmem:[#allocation7 + $0xc] sm:$0xf]
        %v947 = vld [vmem:[#allocation7 + $0x10] sm:$0xf]
        %v948 = vld [vmem:[#allocation7 + $0x14] sm:$0xf]
        %v949 = vld [vmem:[#allocation7 + $0x18] sm:$0xf]
        %v950 = vld [vmem:[#allocation7 + $0x1c] sm:$0xf]
        %v951 = vld [vmem:[#allocation7 + $0x20] sm:$0xf]
        %v952 = vld [vmem:[#allocation7 + $0x24] sm:$0xf]
        %v953 = vld [vmem:[#allocation7 + $0x28] sm:$0xf]
        %v954 = vld [vmem:[#allocation7 + $0x2c] sm:$0xf]
        %v955 = vld [vmem:[#allocation7 + $0x30] sm:$0xf]
        %v956 = vld [vmem:[#allocation7 + $0x34] sm:$0xf]
        %v957 = vld [vmem:[#allocation7 + $0x38] sm:$0xf]
        %v958 = vld [vmem:[#allocation7 + $0x3c] sm:$0xf]
        %v975 = vunpack.c.l.b16 %v927
        %v976 = vunpack.c.l.b16 %v928
        %v977 = vunpack.c.l.b16 %v929
        %v978 = vunpack.c.l.b16 %v930
        %v979 = vunpack.c.l.b16 %v931
        %v980 = vunpack.c.l.b16 %v932
        %v981 = vunpack.c.l.b16 %v933
        %v982 = vunpack.c.l.b16 %v934
        %v983 = vunpack.c.l.b16 %v935
        %v984 = vunpack.c.l.b16 %v936
        %v985 = vunpack.c.l.b16 %v937
        %v986 = vunpack.c.l.b16 %v938
        %v987 = vunpack.c.l.b16 %v939
        %v988 = vunpack.c.l.b16 %v940
        %v989 = vunpack.c.l.b16 %v941
        %v990 = vunpack.c.l.b16 %v942
        %v991 = vpack.c.b16 %v976, %v975
        %v992 = vpack.c.b16 %v978, %v977
        %v993 = vpack.c.b16 %v980, %v979
        %v994 = vpack.c.b16 %v982, %v981
        %v995 = vpack.c.b16 %v984, %v983
        %v996 = vpack.c.b16 %v986, %v985
        %v997 = vpack.c.b16 %v988, %v987
        %v998 = vpack.c.b16 %v990, %v989
        %v1023 = vunpack.c.l.b16 %v943
        %v1024 = vunpack.c.l.b16 %v944
        %v1025 = vunpack.c.l.b16 %v945
        %v1026 = vunpack.c.l.b16 %v946
        %v1027 = vunpack.c.l.b16 %v947
        %v1028 = vunpack.c.l.b16 %v948
        %v1029 = vunpack.c.l.b16 %v949
        %v1030 = vunpack.c.l.b16 %v950
        %v1031 = vunpack.c.l.b16 %v951
        %v1032 = vunpack.c.l.b16 %v952
        %v1033 = vunpack.c.l.b16 %v953
        %v1034 = vunpack.c.l.b16 %v954
        %v1035 = vunpack.c.l.b16 %v955
        %v1036 = vunpack.c.l.b16 %v956
        %v1037 = vunpack.c.l.b16 %v957
        %v1038 = vunpack.c.l.b16 %v958
        %v1039 = vpack.c.b16 %v1024, %v1023
        %v1040 = vpack.c.b16 %v1026, %v1025
        %v1041 = vpack.c.b16 %v1028, %v1027
        %v1042 = vpack.c.b16 %v1030, %v1029
        %v1043 = vpack.c.b16 %v1032, %v1031
        %v1044 = vpack.c.b16 %v1034, %v1033
        %v1045 = vpack.c.b16 %v1036, %v1035
        %v1046 = vpack.c.b16 %v1038, %v1037
        %1055 = vmatpush.bf16.msra.mxu0 %v1046
        %1056 = vmatpush.bf16.msra.mxu0 %v1045
        %1057 = vmatpush.bf16.msra.mxu0 %v1044
        %1058 = vmatpush.bf16.msra.mxu0 %v1043
        %1059 = vmatpush.bf16.msra.mxu0 %v1042
        %1060 = vmatpush.bf16.msra.mxu0 %v1041
        %1061 = vmatpush.bf16.msra.mxu0 %v1040
        %1062 = vmatpush.bf16.msra.mxu0 %v1039
        %1063 = vmatmul.bf16.gmra.mxu0 %v991
        %v1064 = vpop.f32.mrf.mxu0
        %v1065 = vadd.f32 %v804, %v1064
        %v1066 = vpop.f32.mrf.mxu0
        %v1067 = vadd.f32 %v806, %v1066
        %1068 = vmatmul.bf16.gmra.mxu0 %v992
        %v1069 = vpop.f32.mrf.mxu0
        %v1070 = vadd.f32 %v821, %v1069
        %v1071 = vpop.f32.mrf.mxu0
        %v1072 = vadd.f32 %v823, %v1071
        %1073 = vmatmul.bf16.gmra.mxu0 %v993
        %v1074 = vpop.f32.mrf.mxu0
        %v1075 = vadd.f32 %v838, %v1074
        %v1076 = vpop.f32.mrf.mxu0
        %v1077 = vadd.f32 %v840, %v1076
        %1078 = vmatmul.bf16.gmra.mxu0 %v994
        %v1079 = vpop.f32.mrf.mxu0
        %v1080 = vadd.f32 %v855, %v1079
        %v1081 = vpop.f32.mrf.mxu0
        %v1082 = vadd.f32 %v857, %v1081
        %1083 = vmatmul.bf16.gmra.mxu0 %v995
        %v1084 = vpop.f32.mrf.mxu0
        %v1085 = vadd.f32 %v872, %v1084
        %v1086 = vpop.f32.mrf.mxu0
        %v1087 = vadd.f32 %v874, %v1086
        %1088 = vmatmul.bf16.gmra.mxu0 %v996
        %v1089 = vpop.f32.mrf.mxu0
        %v1090 = vadd.f32 %v889, %v1089
        %v1091 = vpop.f32.mrf.mxu0
        %v1092 = vadd.f32 %v891, %v1091
        %1093 = vmatmul.bf16.gmra.mxu0 %v997
        %v1094 = vpop.f32.mrf.mxu0
        %v1095 = vadd.f32 %v906, %v1094
        %v1096 = vpop.f32.mrf.mxu0
        %v1097 = vadd.f32 %v908, %v1096
        %1098 = vmatmul.bf16.gmra.mxu0 %v998
        %v1099 = vpop.f32.mrf.mxu0
        %v1100 = vadd.f32 %v923, %v1099
        %v1101 = vpop.f32.mrf.mxu0
        %v1102 = vadd.f32 %v925, %v1101
        %1103 = vdwg.mxu0
        %v1104 = vld [vmem:[%s4] sm:$0x1]
        %v1106 = vperm.slane %v1104, 0
        %v1108 = vadd.f32 %v1065, %v1106
        %v1109 = vadd.f32 %v1067, %v1106
        %v1110 = vadd.f32 %v1070, %v1106
        %v1111 = vadd.f32 %v1072, %v1106
        %v1112 = vadd.f32 %v1075, %v1106
        %v1113 = vadd.f32 %v1077, %v1106
        %v1114 = vadd.f32 %v1080, %v1106
        %v1115 = vadd.f32 %v1082, %v1106
        %v1116 = vadd.f32 %v1085, %v1106
        %v1117 = vadd.f32 %v1087, %v1106
        %v1118 = vadd.f32 %v1090, %v1106
        %v1119 = vadd.f32 %v1092, %v1106
        %v1120 = vadd.f32 %v1095, %v1106
        %v1121 = vadd.f32 %v1097, %v1106
        %v1122 = vadd.f32 %v1100, %v1106
        %v1123 = vadd.f32 %v1102, %v1106
        %1124 = vst [vmem:[%s402] sm:$0xff] %v1108
        %1125 = vst [vmem:[%s402 + $0x8] sm:$0xff] %v1109
        %1126 = vst [vmem:[%s402 + $0x10] sm:$0xff] %v1110
        %1127 = vst [vmem:[%s402 + $0x18] sm:$0xff] %v1111
        %1128 = vst [vmem:[%s402 + $0x20] sm:$0xff] %v1112
        %1129 = vst [vmem:[%s402 + $0x28] sm:$0xff] %v1113
        %1130 = vst [vmem:[%s402 + $0x30] sm:$0xff] %v1114
        %1131 = vst [vmem:[%s402 + $0x38] sm:$0xff] %v1115
        %1132 = vst [vmem:[%s402 + $0x40] sm:$0xff] %v1116
        %1133 = vst [vmem:[%s402 + $0x48] sm:$0xff] %v1117
        %1134 = vst [vmem:[%s402 + $0x50] sm:$0xff] %v1118
        %1135 = vst [vmem:[%s402 + $0x58] sm:$0xff] %v1119
        %1136 = vst [vmem:[%s402 + $0x60] sm:$0xff] %v1120
        %1137 = vst [vmem:[%s402 + $0x68] sm:$0xff] %v1121
        %1138 = vst [vmem:[%s402 + $0x70] sm:$0xff] %v1122
        %1139 = vst [vmem:[%s402 + $0x78] sm:$0xff] %v1123
        %s1140 = sand.u32 %s214, 1
        %s1141 = scalar_lea.sflag [#allocation4], %s1140
        %s1142 = sand.u32 %s214, 1
        %s1143 = smul.addr %s1142, 128
        %s1144 = scalar_lea.vmem [#allocation10], %s1143
        // Predicated region
        $region65: #{tpu_custom_call.1} parent=47 // pred_check
          %p1145 = pneg %p224
        $region66: #{tpu_custom_call.1} parent=47 // pred_check_branch
          %1147 = sbr.rel (%p1145) target = $region68
        $region67: #{tpu_custom_call.1} parent=47 // pred_region
          %s1148 = smul.u32 16, %s33
          %1150 = vsyncadd %s1141, 0
          %s1151 = smul.addr %s32, 32
          %s1152 = sadd.s32 %s1148, %s1151
          %s1153 = smul.addr %s1152, 8
          %s1154 = scalar_lea.hbm %s7, %s1153
          %s1155 = sshll.u32 %s1144, 4
          %s1156 = int_to_ptr.vmem [resolvable:$true] %s1155
          %s1157 = sshll.u32 %s1154, 4
          %s1158 = int_to_ptr.hbm [resolvable:$true] %s1157
          %1163 = dma.vmem_to_hbm [thread:$0]  %s1156, 2048, %s1158, %s1141, 128, 128, 8
        $region68: #{tpu_custom_call.1} parent=47 // pred_fallthru
          _
      $region48: #{tpu_custom_call.1} parent=5 // pred_fallthru
        _
      %p1164 = scmp.le.s32.totalorder 2, %s23
      // Predicated region
      $region69: #{tpu_custom_call.1} parent=5 // pred_check
        %p1165 = pneg %p1164
      $region70: #{tpu_custom_call.1} parent=5 // pred_check_branch
        %1167 = sbr.rel (%p1165) target = $region72
      $region71: #{tpu_custom_call.1} parent=5 // pred_region
        %s1168 = ssub.s32 %s23, 2
        // Predicated region
        $region73: #{tpu_custom_call.1} parent=71 // pred_check
          %p1169 = pneg %p230
        $region74: #{tpu_custom_call.1} parent=71 // pred_check_branch
          %1171 = sbr.rel (%p1169) target = $region76
        $region75: #{tpu_custom_call.1} parent=71 // pred_region
          %s1172 = sand.u32 %s215, 1
          %s1173 = scalar_lea.sflag [#allocation4], %s1172
          %s1174 = sand.u32 %s215, 1
          %s1175 = smul.addr %s1174, 128
          %s1176 = scalar_lea.vmem [#allocation10], %s1175
          %1178 = dma.done %s1173, 2048
        $region76: #{tpu_custom_call.1} parent=71 // pred_fallthru
          _
      $region72: #{tpu_custom_call.1} parent=5 // pred_fallthru
        _
    $region6: #{tpu_custom_call.1} parent=1 // loop_footer
      %s27 = sadd.s32 1, %s23
    $region7: #{tpu_custom_call.1} parent=1 // loop_footer_branch
      %22 = sbr.rel target = $region3
    $region8: #{tpu_custom_call.1} parent=1 // loop_exit
      _
    %1179 = vsyncpa [#allocation3], 1
    %s1180 = scalar_lea.sflag [#allocation3], 1
    %1181 = vsyncpa %s1180, 1
    %1182 = vsyncpa [#allocation6], 1
    %s1183 = scalar_lea.sflag [#allocation6], 1
    %1184 = vsyncpa %s1183, 1
    %1185 = vsyncpa [#allocation9], 1
    %1186 = vsyncpa [#allocation4], 1
    %s1187 = scalar_lea.sflag [#allocation4], 1
    %1188 = vsyncpa %s1187, 1

</llo_original>
